<compile_context>
chip_gen: v7x
topology: tpu7x:2x2x1
jax: 0.10.0
libtpu: 0.0.40
codegen_flags: <defaults>
</compile_context>

<pallas_src>
import functools

import jax
import jax.numpy as jnp
from jax.experimental import pallas as pl
from jax.experimental.pallas import tpu as pltpu

LANE = 128


def _round_up(x, m):
    return (x + m - 1) // m * m


def _pad_2d(x, rows, cols):
    r, c = x.shape
    if r == rows and c == cols:
        return x
    return jnp.pad(x, ((0, rows - r), (0, cols - c)))


def _pow2_tile(n, cap):
    """Largest power-of-two multiple of 128 <= min(n, cap), at least 128."""
    limit = max(min(n, cap), LANE)
    t = LANE
    while t * 2 <= limit:
        t *= 2
    return t


def _plan_tiles(n, tm_desired=1024, tk_desired=2048):
    """Pick (tm, tk, n_pad): tiles are pow2*128, n padded up to a tm multiple."""
    n128 = _round_up(n, LANE)
    tm = _pow2_tile(n128, tm_desired)
    # v7x has 2 TensorCores: keep >= 2 blocks on the parallel row axis.
    if n128 // tm < 2 and tm > LANE:
        tm //= 2
    n_pad = _round_up(n128, tm)
    tk = _pow2_tile(n_pad, tk_desired)
    while n_pad % tk:
        tk //= 2
    return tm, tk, n_pad


def _vmem_limit_bytes():
    """64 MiB on 128-MiB-VMEM chips (v5e/v6e); ~48 MiB on v7x; safe fallback."""
    cap = None
    try:
        info = pltpu.get_tpu_info()
        cap = getattr(info, "vmem_capacity_bytes", None)
    except Exception:
        cap = None
    if cap is None:
        cap = 64 * 1024 * 1024
    return int(min(cap - 16 * 1024 * 1024, 64 * 1024 * 1024))


# ---------------------------------------------------------------------------
# Kernels
# ---------------------------------------------------------------------------
def _transform_kernel(x_ref, w_ref, b_ref, o_ref, *, apply_relu, add_bias):
    """o = relu?( x @ w (+ b) ) for one row tile (bf16 in, f32 accumulate)."""
    h = jnp.dot(x_ref[...], w_ref[...], preferred_element_type=jnp.float32)
    if add_bias:
        h = h + b_ref[...]
    if apply_relu:
        h = jnp.maximum(h, 0.0)
    o_ref[...] = h.astype(o_ref.dtype)


def _agg_kernel(a_ref, h_ref, b_ref, o_ref, acc_ref, *, apply_relu, add_bias):
    """o[i] = relu?( sum_k a[i,k] @ h[k] (+ b) ), K-tiled, f32 accumulator."""
    k = pl.program_id(1)

    @pl.when(k == 0)
    def _():
        acc_ref[...] = jnp.zeros_like(acc_ref)

    acc_ref[...] += jnp.dot(a_ref[...], h_ref[...],
                            preferred_element_type=jnp.float32)

    @pl.when(k == pl.num_programs(1) - 1)
    def _():
        out = acc_ref[...]
        if add_bias:
            out = out + b_ref[...]
        if apply_relu:
            out = jnp.maximum(out, 0.0)
        o_ref[...] = out.astype(o_ref.dtype)


def _agg_fused_kernel(a_ref, h_ref, w_ref, b_ref, o_ref, acc_ref, *,
                      apply_relu):
    """o[i] = relu?( (sum_k a[i,k] @ h[k]) @ W + b ).

    K-tiled A@H with an f32 accumulator; the weight transform, bias and ReLU
    run in the finalize block, fed directly from the f32 accumulator (no HBM
    round trip / bf16 rounding of the intermediate).
    """
    k = pl.program_id(1)

    @pl.when(k == 0)
    def _():
        acc_ref[...] = jnp.zeros_like(acc_ref)

    acc_ref[...] += jnp.dot(a_ref[...], h_ref[...],
                            preferred_element_type=jnp.float32)

    @pl.when(k == pl.num_programs(1) - 1)
    def _():
        out = jnp.dot(acc_ref[...], w_ref[...],
                      preferred_element_type=jnp.float32)
        out = out + b_ref[...]
        if apply_relu:
            out = jnp.maximum(out, 0.0)
        o_ref[...] = out.astype(o_ref.dtype)


# ---------------------------------------------------------------------------
# pallas_call wrappers
# ---------------------------------------------------------------------------
def _transform(h_p, w_p, bias, *, apply_relu, out_dtype, tm, vmem_limit):
    """relu?(H @ W (+ b)); H:(Np, Fin_p) bf16, W:(Fin_p, Fout_p) bf16."""
    n_pad, f_in = h_p.shape
    f_out = w_p.shape[1]
    add_bias = bias is not None
    if bias is None:
        bias = jnp.zeros((1, f_out), jnp.float32)

    return pl.pallas_call(
        functools.partial(_transform_kernel,
                          apply_relu=apply_relu, add_bias=add_bias),
        out_shape=jax.ShapeDtypeStruct((n_pad, f_out), out_dtype),
        grid_spec=pltpu.PrefetchScalarGridSpec(
            num_scalar_prefetch=0,
            grid=(n_pad // tm,),
            in_specs=[
                pl.BlockSpec((tm, f_in), lambda i: (i, 0)),     # H rows
                pl.BlockSpec((f_in, f_out), lambda i: (0, 0)),  # W (resident)
                pl.BlockSpec((1, f_out), lambda i: (0, 0)),     # bias
            ],
            out_specs=pl.BlockSpec((tm, f_out), lambda i: (i, 0)),
        ),
        compiler_params=pltpu.CompilerParams(
            dimension_semantics=("parallel",),
            vmem_limit_bytes=vmem_limit),
    )(h_p, w_p, bias)


def _aggregate(a_p, h_p, bias, *, apply_relu, out_dtype, tm, tk, vmem_limit):
    """relu?(A @ H (+ b)); A:(Np, Np) bf16, H:(Np, F_p) bf16."""
    n_pad = a_p.shape[0]
    f = h_p.shape[1]
    add_bias = bias is not None
    if bias is None:
        bias = jnp.zeros((1, f), jnp.float32)

    return pl.pallas_call(
        functools.partial(_agg_kernel,
                          apply_relu=apply_relu, add_bias=add_bias),
        out_shape=jax.ShapeDtypeStruct((n_pad, f), out_dtype),
        grid_spec=pltpu.PrefetchScalarGridSpec(
            num_scalar_prefetch=0,
            grid=(n_pad // tm, n_pad // tk),
            in_specs=[
                pl.BlockSpec((tm, tk), lambda i, k: (i, k)),  # A tile
                pl.BlockSpec((tk, f), lambda i, k: (k, 0)),   # H slab
                pl.BlockSpec((1, f), lambda i, k: (0, 0)),    # bias
            ],
            out_specs=pl.BlockSpec((tm, f), lambda i, k: (i, 0)),
            scratch_shapes=[pltpu.VMEM((tm, f), jnp.float32)],
        ),
        compiler_params=pltpu.CompilerParams(
            dimension_semantics=("parallel", "arbitrary"),
            vmem_limit_bytes=vmem_limit),
    )(a_p, h_p, bias)


def _aggregate_fused(a_p, h_p, w_p, bias, *, apply_relu, out_dtype,
                     tm, tk, vmem_limit):
    """relu?((A @ H) @ W + b); A:(Np,Np) bf16, H:(Np,Fin_p) bf16, W f32."""
    n_pad = a_p.shape[0]
    f_in = h_p.shape[1]
    f_out = w_p.shape[1]

    return pl.pallas_call(
        functools.partial(_agg_fused_kernel, apply_relu=apply_relu),
        out_shape=jax.ShapeDtypeStruct((n_pad, f_out), out_dtype),
        grid_spec=pltpu.PrefetchScalarGridSpec(
            num_scalar_prefetch=0,
            grid=(n_pad // tm, n_pad // tk),
            in_specs=[
                pl.BlockSpec((tm, tk), lambda i, k: (i, k)),       # A tile
                pl.BlockSpec((tk, f_in), lambda i, k: (k, 0)),     # H slab
                pl.BlockSpec((f_in, f_out), lambda i, k: (0, 0)),  # W resident
                pl.BlockSpec((1, f_out), lambda i, k: (0, 0)),     # bias
            ],
            out_specs=pl.BlockSpec((tm, f_out), lambda i, k: (i, 0)),
            scratch_shapes=[pltpu.VMEM((tm, f_in), jnp.float32)],
        ),
        compiler_params=pltpu.CompilerParams(
            dimension_semantics=("parallel", "arbitrary"),
            vmem_limit_bytes=vmem_limit),
    )(a_p, h_p, w_p, bias)


def _gcn_layer(a_p, h_p, w_p, b_p, *, apply_relu, out_dtype, tm, tk,
               vmem_limit):
    """One GraphConv(norm='both') layer on padded operands."""
    f_in, f_out = w_p.shape
    if f_in <= f_out:
        # (A @ H) @ W + b : N^2 aggregation over the narrower width, with the
        # weight transform / bias / ReLU fused into the finalize epilogue.
        return _aggregate_fused(a_p, h_p, w_p, b_p, apply_relu=apply_relu,
                                out_dtype=out_dtype, tm=tm, tk=tk,
                                vmem_limit=vmem_limit)
    else:
        # A @ (H @ W) + b : shrink the feature width first, then aggregate.
        hw = _transform(h_p, w_p.astype(jnp.bfloat16), None, apply_relu=False,
                        out_dtype=jnp.bfloat16, tm=tm, vmem_limit=vmem_limit)
        return _aggregate(a_p, hw, b_p, apply_relu=apply_relu,
                          out_dtype=out_dtype, tm=tm, tk=tk,
                          vmem_limit=vmem_limit)


def gcn_forward(a_norm, x, params, *, tm_desired=1024, tk_desired=2048):
    """Matches GCN.forward: ReLU after every conv except the last."""
    n = a_norm.shape[0]
    tm, tk, n_pad = _plan_tiles(n, tm_desired, tk_desired)
    vmem_limit = _vmem_limit_bytes()

    a_p = _pad_2d(a_norm, n_pad, n_pad).astype(jnp.bfloat16)
    h = _pad_2d(x, n_pad, _round_up(x.shape[1], LANE)).astype(jnp.bfloat16)

    n_layers = len(params)
    for i, (w, b) in enumerate(params):
        d_in, d_out = w.shape
        w_p = _pad_2d(w, _round_up(d_in, LANE),
                      _round_up(d_out, LANE)).astype(jnp.float32)
        b_p = _pad_2d(b, 1, _round_up(d_out, LANE)).astype(jnp.float32)
        last = (i == n_layers - 1)
        h = _gcn_layer(a_p, h, w_p, b_p,
                       apply_relu=not last,
                       out_dtype=jnp.float32 if last else jnp.bfloat16,
                       tm=tm, tk=tk, vmem_limit=vmem_limit)

    out_dim = params[-1][0].shape[1]
    return h[:n, :out_dim]


# ---------------------------------------------------------------------------
# Graph / params construction + pure-JAX reference
# ---------------------------------------------------------------------------
def build_normalized_adjacency(key, n_nodes, n_edges):
    """Dense A_norm = D_in^-1/2 A D_out^-1/2, degrees clamped to >= 1 (as DGL)."""
    k_src, k_dst = jax.random.split(key)
    src = jax.random.randint(k_src, (n_edges,), 0, n_nodes)
    dst = jax.random.randint(k_dst, (n_edges,), 0, n_nodes)
    adj = jnp.zeros((n_nodes, n_nodes), jnp.float32).at[dst, src].add(1.0)
    out_deg = jnp.clip(adj.sum(axis=0), 1.0, None)   # per source node
    in_deg = jnp.clip(adj.sum(axis=1), 1.0, None)    # per destination node
    return (in_deg ** -0.5)[:, None] * adj * (out_deg ** -0.5)[None, :]


def init_gcn_params(key, in_dim, hid_dim, out_dim, n_layers):
    """Xavier-uniform weights, zero bias (DGL GraphConv defaults)."""
    if n_layers == 1:
        layer_dims = [(in_dim, hid_dim)]
    else:
        layer_dims = ([(in_dim, hid_dim)]
                      + [(hid_dim, hid_dim)] * (n_layers - 2)
                      + [(hid_dim, out_dim)])
    params = []
    for d_in, d_out in layer_dims:
        key, k_w = jax.random.split(key)
        limit = (6.0 / (d_in + d_out)) ** 0.5
        w = jax.random.uniform(k_w, (d_in, d_out), jnp.float32, -limit, limit)
        b = jnp.zeros((1, d_out), jnp.float32)
        params.append((w, b))
    return params


def gcn_reference(a_norm, x, params):
    """Pure-JAX f32 reference for correctness checking."""
    n_layers = len(params)
    for i, (w, b) in enumerate(params):
        x = a_norm @ (x @ w) + b
        if i < n_layers - 1:
            x = jnp.maximum(x, 0.0)
    return x


if __name__ == "__main__":
    key = jax.random.PRNGKey(0)
    k_graph, k_feat, k_params = jax.random.split(key, 3)

    n_nodes, n_edges = 128, 512
    in_dim, hid_dim, out_dim, n_layers = 16, 32, 8, 3

    a_norm = build_normalized_adjacency(k_graph, n_nodes, n_edges)
    x = jax.random.normal(k_feat, (n_nodes, in_dim), jnp.float32)
    params = init_gcn_params(k_params, in_dim, hid_dim, out_dim, n_layers)

    out = jax.block_until_ready(gcn_forward(a_norm, x, params))

    ref = gcn_reference(a_norm, x, params)
    assert out.shape == (n_nodes, out_dim)
    max_err = float(jnp.max(jnp.abs(out - ref)))
    # bf16 data streams (f32 accumulation) vs. pure-f32 reference.
    assert jnp.allclose(out, ref, rtol=5e-2, atol=5e-2), (
        f"mismatch vs reference, max abs err = {max_err}")

    print("KERNEL_OK")
</pallas_src>

<mosaic_0001>
module attributes {stable_mosaic.version = 11 : i64} {
  func.func @_agg_fused_kernel(%arg0: i32, %arg1: i32, %arg2: memref<128x128xbf16, #tpu.memory_space<vmem>>, %arg3: memref<128x128xbf16, #tpu.memory_space<vmem>>, %arg4: memref<128x128xf32, #tpu.memory_space<vmem>>, %arg5: memref<1x128xf32, #tpu.memory_space<vmem>>, %arg6: memref<128x128xbf16, #tpu.memory_space<vmem>>, %arg7: memref<128x128xf32, #tpu.memory_space<vmem>>) attributes {dimension_semantics = [#tpu.dimension_semantics<parallel>, #tpu.dimension_semantics<arbitrary>], iteration_bounds = array<i64: 1, 1>, scalar_prefetch = 0 : i64, scratch_operands = 1 : i64, tpu.core_type = #tpu.core_type<tc>, window_params = [{transform_indices = @transform_0, window_bounds = array<i64: 128, 128>}, {transform_indices = @transform_1, window_bounds = array<i64: 128, 128>}, {pipeline_mode = #tpu.pipeline_mode<synchronous>, transform_indices = @transform_2, window_bounds = array<i64: 128, 128>}, {pipeline_mode = #tpu.pipeline_mode<synchronous>, transform_indices = @transform_3, window_bounds = array<i64: 1, 128>}, {transform_indices = @transform_4, window_bounds = array<i64: 128, 128>}]} {
    %c0_i32 = arith.constant 0 : i32
    %0 = arith.cmpi eq, %arg1, %c0_i32 : i32
    %1 = arith.extui %0 : i1 to i32
    %c0_i32_0 = arith.constant 0 : i32
    %2 = arith.cmpi ne, %1, %c0_i32_0 : i32
    scf.if %2 {
      %cst_10 = arith.constant 0.000000e+00 : f32
      %12 = vector.broadcast %cst_10 : f32 to vector<128x128xf32>
      %c0_11 = arith.constant 0 : index
      %c0_12 = arith.constant 0 : index
      %13 = vector.load %arg7[%c0_11, %c0_12] : memref<128x128xf32, #tpu.memory_space<vmem>>, vector<128x128xf32>
      tpu.vector_store %arg7[%c0_11, %c0_12], %12 {strides = array<i32>} : memref<128x128xf32, #tpu.memory_space<vmem>>, vector<128x128xf32>,
    } else {
    }
    %c0 = arith.constant 0 : index
    %c0_1 = arith.constant 0 : index
    %3 = vector.load %arg7[%c0, %c0_1] : memref<128x128xf32, #tpu.memory_space<vmem>>, vector<128x128xf32>
    %c0_2 = arith.constant 0 : index
    %c0_3 = arith.constant 0 : index
    %4 = vector.load %arg2[%c0_2, %c0_3] : memref<128x128xbf16, #tpu.memory_space<vmem>>, vector<128x128xbf16>
    %c0_4 = arith.constant 0 : index
    %c0_5 = arith.constant 0 : index
    %5 = vector.load %arg3[%c0_4, %c0_5] : memref<128x128xbf16, #tpu.memory_space<vmem>>, vector<128x128xbf16>
    %cst = arith.constant dense<0.000000e+00> : vector<128x128xf32>
    %6 = tpu.matmul %4, %5, %cst {dimension_numbers = #tpu.dot_dimension_numbers<[1], [0], [0], [1], [0, 0, 1, 1], [], []>} : vector<128x128xbf16>, vector<128x128xbf16>, vector<128x128xf32> -> vector<128x128xf32>
    %7 = arith.addf %3, %6 : vector<128x128xf32>
    %c0_6 = arith.constant 0 : index
    %c0_7 = arith.constant 0 : index
    %8 = vector.load %arg7[%c0_6, %c0_7] : memref<128x128xf32, #tpu.memory_space<vmem>>, vector<128x128xf32>
    tpu.vector_store %arg7[%c0_6, %c0_7], %7 {strides = array<i32>} : memref<128x128xf32, #tpu.memory_space<vmem>>, vector<128x128xf32>,
    %c0_i32_8 = arith.constant 0 : i32
    %9 = arith.cmpi eq, %arg1, %c0_i32_8 : i32
    %10 = arith.extui %9 : i1 to i32
    %c0_i32_9 = arith.constant 0 : i32
    %11 = arith.cmpi ne, %10, %c0_i32_9 : i32
    scf.if %11 {
      %c0_10 = arith.constant 0 : index
      %c0_11 = arith.constant 0 : index
      %12 = vector.load %arg7[%c0_10, %c0_11] : memref<128x128xf32, #tpu.memory_space<vmem>>, vector<128x128xf32>
      %c0_12 = arith.constant 0 : index
      %c0_13 = arith.constant 0 : index
      %13 = vector.load %arg4[%c0_12, %c0_13] : memref<128x128xf32, #tpu.memory_space<vmem>>, vector<128x128xf32>
      %cst_14 = arith.constant dense<0.000000e+00> : vector<128x128xf32>
      %14 = tpu.matmul %12, %13, %cst_14 {dimension_numbers = #tpu.dot_dimension_numbers<[1], [0], [0], [1], [0, 0, 1, 1], [], []>} : vector<128x128xf32>, vector<128x128xf32>, vector<128x128xf32> -> vector<128x128xf32>
      %c0_15 = arith.constant 0 : index
      %c0_16 = arith.constant 0 : index
      %15 = vector.load %arg5[%c0_15, %c0_16] : memref<1x128xf32, #tpu.memory_space<vmem>>, vector<1x128xf32>
      %16 = vector.broadcast %15 : vector<1x128xf32> to vector<128x128xf32>
      %17 = arith.addf %14, %16 : vector<128x128xf32>
      %cst_17 = arith.constant 0.000000e+00 : f32
      %18 = vector.broadcast %cst_17 : f32 to vector<128x128xf32>
      %19 = arith.maximumf %17, %18 : vector<128x128xf32>
      %20 = arith.truncf %19 : vector<128x128xf32> to vector<128x128xbf16>
      %c0_18 = arith.constant 0 : index
      %c0_19 = arith.constant 0 : index
      %21 = vector.load %arg6[%c0_18, %c0_19] : memref<128x128xbf16, #tpu.memory_space<vmem>>, vector<128x128xbf16>
      tpu.vector_store %arg6[%c0_18, %c0_19], %20 {strides = array<i32>} : memref<128x128xbf16, #tpu.memory_space<vmem>>, vector<128x128xbf16>,
    } else {
    }
    return
  }
  func.func @transform_0(%arg0: i32, %arg1: i32) -> (i32, i32) {
    %c0_i32 = arith.constant 0 : i32
    return %arg0, %arg1 : i32, i32
  }
  func.func @transform_1(%arg0: i32, %arg1: i32) -> (i32, i32) {
    %c0_i32 = arith.constant 0 : i32
    %c0_i32_0 = arith.constant 0 : i32
    return %arg1, %c0_i32 : i32, i32
  }
  func.func @transform_2(%arg0: i32, %arg1: i32) -> (i32, i32) {
    %c0_i32 = arith.constant 0 : i32
    %c0_i32_0 = arith.constant 0 : i32
    %c0_i32_1 = arith.constant 0 : i32
    return %c0_i32, %c0_i32_0 : i32, i32
  }
  func.func @transform_3(%arg0: i32, %arg1: i32) -> (i32, i32) {
    %c0_i32 = arith.constant 0 : i32
    %c0_i32_0 = arith.constant 0 : i32
    %c0_i32_1 = arith.constant 0 : i32
    return %c0_i32, %c0_i32_0 : i32, i32
  }
  func.func @transform_4(%arg0: i32, %arg1: i32) -> (i32, i32) {
    %c0_i32 = arith.constant 0 : i32
    %c0_i32_0 = arith.constant 0 : i32
    return %arg0, %c0_i32 : i32, i32
  }
}

</mosaic_0001>

<llo_original>
// kernel: tpu_custom_call.1
$region0: #{tpu_custom_call.1}
  #allocation0 [shape = 'u32[]', space=smem, size = 0x4, offset = 0x4, fixed_abs, tag = 'smem constant byte address 0x4 - core index']
  #allocation1 [shape = 'u32[144,128]{1,0:T(1,128)}', space=vmem, size = 0x12000, scoped, tag = 'internal scratch']
  #allocation2 [shape = 'f32[128,128]{1,0:T(8,128)}', space=vmem, size = 0x10000, scoped, tag = 'scratch operand']
  %s0 = inlined_call_operand.hbm [shape: bf16[128,128], index: 0, kind: input, shape index: {}]
  %s1 = inlined_call_operand.hbm [shape: bf16[128,128], index: 1, kind: input, shape index: {}]
  %s2 = inlined_call_operand.hbm [shape: f32[128,128], index: 2, kind: input, shape index: {}]
  %s3 = inlined_call_operand.vmem [shape: f32[1,128], index: 3, kind: input, shape index: {}]
  %s4 = inlined_call_operand.hbm [shape: bf16[128,128], index: 4, kind: output, shape index: {}]
  %s5 = sld [smem:[#allocation0]]
  $region46: #{tpu_custom_call.1} parent=0
    _
  %s7 = ssub.s32 1, %s5
  %s8 = scalar_select 0, %s7, %s5
  $region1: #{tpu_custom_call.1} parent=0
    #allocation3 [shape = 'u8[32768]{0}', space=vmem, size = 0x8000, scoped, tag = 'input window, operand 0, single buffered']
    #allocation4 [shape = 's32[1]{0}', space=sflag, size = 0x4, scoped, tag = 'scoped memory for tpu_custom_call.1']
    #allocation5 [shape = 's32[1]{0}', space=sflag, size = 0x4, scoped, tag = 'scoped memory for tpu_custom_call.1']
    #allocation6 [shape = 'u8[32768]{0}', space=vmem, size = 0x8000, scoped, tag = 'input window, operand 1, single buffered']
    #allocation7 [shape = 's32[1]{0}', space=sflag, size = 0x4, scoped, tag = 'scoped memory for tpu_custom_call.1']
    #allocation8 [shape = 'u8[65536]{0}', space=vmem, size = 0x10000, scoped, tag = 'input window, operand 2, single buffered']
    #allocation9 [shape = 'u8[32768]{0}', space=vmem, size = 0x8000, scoped, tag = 'output window, operand 0, single buffered']
    %9 = vsyncpa [#allocation4], 0
    %10 = vsyncpa [#allocation7], 0
    %11 = vsyncpa [#allocation5], 0
    // Predicated region
    $region2: #{tpu_custom_call.1} parent=1 // pred_check
      _
    $region3: #{tpu_custom_call.1} parent=1 // pred_check_branch
      %13 = sbr.rel (0) target = $region5
    $region4: #{tpu_custom_call.1} parent=1 // pred_region
      %s15 = ssub.s32 1024, 1024
      %16 = vsyncadd [#allocation4], %s15
      %s17 = sshll.u32 [#allocation3], 4
      %s18 = int_to_ptr.vmem [resolvable:$true] %s17
      %23 = dma.hbm_to_vmem [thread:$0]  %s0, 1024, %s18, [#allocation4], 64, 64, 4
    $region5: #{tpu_custom_call.1} parent=1 // pred_fallthru
      _
    // Predicated region
    $region6: #{tpu_custom_call.1} parent=1 // pred_check
      _
    $region7: #{tpu_custom_call.1} parent=1 // pred_check_branch
      %25 = sbr.rel (0) target = $region9
    $region8: #{tpu_custom_call.1} parent=1 // pred_region
      %s27 = ssub.s32 1024, 1024
      %28 = vsyncadd [#allocation7], %s27
      %s29 = sshll.u32 [#allocation6], 4
      %s30 = int_to_ptr.vmem [resolvable:$true] %s29
      %35 = dma.hbm_to_vmem [thread:$0]  %s1, 1024, %s30, [#allocation7], 64, 64, 4
    $region9: #{tpu_custom_call.1} parent=1 // pred_fallthru
      _
    // Predicated region
    $region10: #{tpu_custom_call.1} parent=1 // pred_check
      _
    $region11: #{tpu_custom_call.1} parent=1 // pred_check_branch
      %37 = sbr.rel (0) target = $region13
    $region12: #{tpu_custom_call.1} parent=1 // pred_region
      %s39 = ssub.s32 2048, 2048
      %40 = vsyncadd [#allocation7], %s39
      %s41 = sshll.u32 [#allocation8], 4
      %s42 = int_to_ptr.vmem [resolvable:$true] %s41
      %47 = dma.hbm_to_vmem [thread:$0]  %s2, 2048, %s42, [#allocation7], 128, 128, 8
    $region13: #{tpu_custom_call.1} parent=1 // pred_fallthru
      _
    // Predicated region
    $region14: #{tpu_custom_call.1} parent=1 // pred_check
      _
    $region15: #{tpu_custom_call.1} parent=1 // pred_check_branch
      %49 = sbr.rel (0) target = $region17
    $region16: #{tpu_custom_call.1} parent=1 // pred_region
      _
    $region17: #{tpu_custom_call.1} parent=1 // pred_fallthru
      _
    // Predicated region
    $region18: #{tpu_custom_call.1} parent=1 // pred_check
      _
    $region19: #{tpu_custom_call.1} parent=1 // pred_check_branch
      %51 = sbr.rel (0) target = $region21
    $region20: #{tpu_custom_call.1} parent=1 // pred_region
      %52 = dma.done [#allocation4], 1024
    $region21: #{tpu_custom_call.1} parent=1 // pred_fallthru
      _
    // Predicated region
    $region22: #{tpu_custom_call.1} parent=1 // pred_check
      _
    $region23: #{tpu_custom_call.1} parent=1 // pred_check_branch
      %54 = sbr.rel (0) target = $region25
    $region24: #{tpu_custom_call.1} parent=1 // pred_region
      %55 = dma.done [#allocation7], 1024
    $region25: #{tpu_custom_call.1} parent=1 // pred_fallthru
      _
    // Predicated region
    $region26: #{tpu_custom_call.1} parent=1 // pred_check
      _
    $region27: #{tpu_custom_call.1} parent=1 // pred_check_branch
      %57 = sbr.rel (0) target = $region29
    $region28: #{tpu_custom_call.1} parent=1 // pred_region
      %58 = dma.done [#allocation7], 2048
    $region29: #{tpu_custom_call.1} parent=1 // pred_fallthru
      _
    %p60 = scmp.eq.s32.totalorder 0, 0
    // Predicated region
    $region30: #{tpu_custom_call.1} parent=1 // pred_check
      %p61 = pneg %p60
    $region31: #{tpu_custom_call.1} parent=1 // pred_check_branch
      %63 = sbr.rel (%p61) target = $region33
    $region32: #{tpu_custom_call.1} parent=1 // pred_region
      %64 = vst [vmem:[#allocation2] sm:$0xff] 0.0
      %65 = vst [vmem:[#allocation2 + $0x8] sm:$0xff] 0.0
      %66 = vst [vmem:[#allocation2 + $0x10] sm:$0xff] 0.0
      %67 = vst [vmem:[#allocation2 + $0x18] sm:$0xff] 0.0
      %68 = vst [vmem:[#allocation2 + $0x20] sm:$0xff] 0.0
      %69 = vst [vmem:[#allocation2 + $0x28] sm:$0xff] 0.0
      %70 = vst [vmem:[#allocation2 + $0x30] sm:$0xff] 0.0
      %71 = vst [vmem:[#allocation2 + $0x38] sm:$0xff] 0.0
      %72 = vst [vmem:[#allocation2 + $0x40] sm:$0xff] 0.0
      %73 = vst [vmem:[#allocation2 + $0x48] sm:$0xff] 0.0
      %74 = vst [vmem:[#allocation2 + $0x50] sm:$0xff] 0.0
      %75 = vst [vmem:[#allocation2 + $0x58] sm:$0xff] 0.0
      %76 = vst [vmem:[#allocation2 + $0x60] sm:$0xff] 0.0
      %77 = vst [vmem:[#allocation2 + $0x68] sm:$0xff] 0.0
      %78 = vst [vmem:[#allocation2 + $0x70] sm:$0xff] 0.0
      %79 = vst [vmem:[#allocation2 + $0x78] sm:$0xff] 0.0
    $region33: #{tpu_custom_call.1} parent=1 // pred_fallthru
      _
    %v80 = vld [vmem:[#allocation2] sm:$0xff]
    %v81 = vld [vmem:[#allocation2 + $0x8] sm:$0xff]
    %v82 = vld [vmem:[#allocation2 + $0x10] sm:$0xff]
    %v83 = vld [vmem:[#allocation2 + $0x18] sm:$0xff]
    %v84 = vld [vmem:[#allocation2 + $0x20] sm:$0xff]
    %v85 = vld [vmem:[#allocation2 + $0x28] sm:$0xff]
    %v86 = vld [vmem:[#allocation2 + $0x30] sm:$0xff]
    %v87 = vld [vmem:[#allocation2 + $0x38] sm:$0xff]
    %v88 = vld [vmem:[#allocation2 + $0x40] sm:$0xff]
    %v89 = vld [vmem:[#allocation2 + $0x48] sm:$0xff]
    %v90 = vld [vmem:[#allocation2 + $0x50] sm:$0xff]
    %v91 = vld [vmem:[#allocation2 + $0x58] sm:$0xff]
    %v92 = vld [vmem:[#allocation2 + $0x60] sm:$0xff]
    %v93 = vld [vmem:[#allocation2 + $0x68] sm:$0xff]
    %v94 = vld [vmem:[#allocation2 + $0x70] sm:$0xff]
    %v95 = vld [vmem:[#allocation2 + $0x78] sm:$0xff]
    %v96 = vld [vmem:[#allocation3] sm:$0xf]
    %v97 = vld [vmem:[#allocation3 + $0x4] sm:$0xf]
    %v98 = vld [vmem:[#allocation3 + $0x8] sm:$0xf]
    %v99 = vld [vmem:[#allocation3 + $0xc] sm:$0xf]
    %v100 = vld [vmem:[#allocation3 + $0x10] sm:$0xf]
    %v101 = vld [vmem:[#allocation3 + $0x14] sm:$0xf]
    %v102 = vld [vmem:[#allocation3 + $0x18] sm:$0xf]
    %v103 = vld [vmem:[#allocation3 + $0x1c] sm:$0xf]
    %v104 = vld [vmem:[#allocation3 + $0x20] sm:$0xf]
    %v105 = vld [vmem:[#allocation3 + $0x24] sm:$0xf]
    %v106 = vld [vmem:[#allocation3 + $0x28] sm:$0xf]
    %v107 = vld [vmem:[#allocation3 + $0x2c] sm:$0xf]
    %v108 = vld [vmem:[#allocation3 + $0x30] sm:$0xf]
    %v109 = vld [vmem:[#allocation3 + $0x34] sm:$0xf]
    %v110 = vld [vmem:[#allocation3 + $0x38] sm:$0xf]
    %v111 = vld [vmem:[#allocation3 + $0x3c] sm:$0xf]
    %v112 = vld [vmem:[#allocation6] sm:$0xf]
    %v113 = vld [vmem:[#allocation6 + $0x4] sm:$0xf]
    %v114 = vld [vmem:[#allocation6 + $0x8] sm:$0xf]
    %v115 = vld [vmem:[#allocation6 + $0xc] sm:$0xf]
    %v116 = vld [vmem:[#allocation6 + $0x10] sm:$0xf]
    %v117 = vld [vmem:[#allocation6 + $0x14] sm:$0xf]
    %v118 = vld [vmem:[#allocation6 + $0x18] sm:$0xf]
    %v119 = vld [vmem:[#allocation6 + $0x1c] sm:$0xf]
    %v120 = vld [vmem:[#allocation6 + $0x20] sm:$0xf]
    %v121 = vld [vmem:[#allocation6 + $0x24] sm:$0xf]
    %v122 = vld [vmem:[#allocation6 + $0x28] sm:$0xf]
    %v123 = vld [vmem:[#allocation6 + $0x2c] sm:$0xf]
    %v124 = vld [vmem:[#allocation6 + $0x30] sm:$0xf]
    %v125 = vld [vmem:[#allocation6 + $0x34] sm:$0xf]
    %v126 = vld [vmem:[#allocation6 + $0x38] sm:$0xf]
    %v127 = vld [vmem:[#allocation6 + $0x3c] sm:$0xf]
    %v144 = vunpack.c.l.b16 %v96
    %v145 = vunpack.c.l.b16 %v97
    %v146 = vunpack.c.l.b16 %v98
    %v147 = vunpack.c.l.b16 %v99
    %v148 = vunpack.c.l.b16 %v100
    %v149 = vunpack.c.l.b16 %v101
    %v150 = vunpack.c.l.b16 %v102
    %v151 = vunpack.c.l.b16 %v103
    %v152 = vunpack.c.l.b16 %v104
    %v153 = vunpack.c.l.b16 %v105
    %v154 = vunpack.c.l.b16 %v106
    %v155 = vunpack.c.l.b16 %v107
    %v156 = vunpack.c.l.b16 %v108
    %v157 = vunpack.c.l.b16 %v109
    %v158 = vunpack.c.l.b16 %v110
    %v159 = vunpack.c.l.b16 %v111
    %v160 = vpack.c.b16 %v145, %v144
    %v161 = vpack.c.b16 %v147, %v146
    %v162 = vpack.c.b16 %v149, %v148
    %v163 = vpack.c.b16 %v151, %v150
    %v164 = vpack.c.b16 %v153, %v152
    %v165 = vpack.c.b16 %v155, %v154
    %v166 = vpack.c.b16 %v157, %v156
    %v167 = vpack.c.b16 %v159, %v158
    %v192 = vunpack.c.l.b16 %v112
    %v193 = vunpack.c.l.b16 %v113
    %v194 = vunpack.c.l.b16 %v114
    %v195 = vunpack.c.l.b16 %v115
    %v196 = vunpack.c.l.b16 %v116
    %v197 = vunpack.c.l.b16 %v117
    %v198 = vunpack.c.l.b16 %v118
    %v199 = vunpack.c.l.b16 %v119
    %v200 = vunpack.c.l.b16 %v120
    %v201 = vunpack.c.l.b16 %v121
    %v202 = vunpack.c.l.b16 %v122
    %v203 = vunpack.c.l.b16 %v123
    %v204 = vunpack.c.l.b16 %v124
    %v205 = vunpack.c.l.b16 %v125
    %v206 = vunpack.c.l.b16 %v126
    %v207 = vunpack.c.l.b16 %v127
    %v208 = vpack.c.b16 %v193, %v192
    %v209 = vpack.c.b16 %v195, %v194
    %v210 = vpack.c.b16 %v197, %v196
    %v211 = vpack.c.b16 %v199, %v198
    %v212 = vpack.c.b16 %v201, %v200
    %v213 = vpack.c.b16 %v203, %v202
    %v214 = vpack.c.b16 %v205, %v204
    %v215 = vpack.c.b16 %v207, %v206
    %224 = vmatprep.subr.bf16.mxu0 0
    %225 = vmatpush1.bf16.msra.mxu0 %v208
    %226 = vmatprep.subr.bf16.mxu0 0
    %227 = vmatpush1.bf16.msra.mxu0 %v209
    %228 = vmatprep.subr.bf16.mxu0 0
    %229 = vmatpush1.bf16.msra.mxu0 %v210
    %230 = vmatprep.subr.bf16.mxu0 0
    %231 = vmatpush1.bf16.msra.mxu0 %v211
    %232 = vmatprep.subr.bf16.mxu0 0
    %233 = vmatpush1.bf16.msra.mxu0 %v212
    %234 = vmatprep.subr.bf16.mxu0 0
    %235 = vmatpush1.bf16.msra.mxu0 %v213
    %236 = vmatprep.subr.bf16.mxu0 0
    %237 = vmatpush1.bf16.msra.mxu0 %v214
    %238 = vmatprep.subr.bf16.mxu0 0
    %239 = vmatpush1.bf16.msra.mxu0 %v215
    %240 = vmatprep.subr.bf16.mxu0 0
    %241 = vmatpush1.bf16.msra.mxu0 0
    %242 = vmatprep.subr.bf16.mxu0 0
    %243 = vmatpush1.bf16.msra.mxu0 0
    %244 = vmatprep.subr.bf16.mxu0 0
    %245 = vmatpush1.bf16.msra.mxu0 0
    %246 = vmatprep.subr.bf16.mxu0 0
    %247 = vmatpush1.bf16.msra.mxu0 0
    %248 = vmatprep.subr.bf16.mxu0 0
    %249 = vmatpush1.bf16.msra.mxu0 0
    %250 = vmatprep.subr.bf16.mxu0 0
    %251 = vmatpush1.bf16.msra.mxu0 0
    %252 = vmatprep.subr.bf16.mxu0 0
    %253 = vmatpush1.bf16.msra.mxu0 0
    %254 = vmatprep.subr.bf16.mxu0 0
    %255 = vmatpush1.bf16.msra.mxu0 0
    %256 = vmatprep.mubr.bf16.mxu0 0
    %257 = vmatmul.mubr.bf16.gmra.mrb[0].mxu0 %v160
    %v258 = vpop.f32.mrb[0].mxu0
    %v259 = vadd.f32 0.0, %v258
    %v260 = vpop.f32.mrb[0].mxu0
    %v261 = vpop.f32.mrb[0].mxu0
    %v262 = vadd.f32 0.0, %v261
    %v263 = vpop.f32.mrb[0].mxu0
    %264 = vmatprep.mubr.bf16.mxu0 0
    %265 = vmatmul.mubr.bf16.gmra.mrb[0].mxu0 %v161
    %v266 = vpop.f32.mrb[0].mxu0
    %v267 = vadd.f32 0.0, %v266
    %v268 = vpop.f32.mrb[0].mxu0
    %v269 = vpop.f32.mrb[0].mxu0
    %v270 = vadd.f32 0.0, %v269
    %v271 = vpop.f32.mrb[0].mxu0
    %272 = vmatprep.mubr.bf16.mxu0 0
    %273 = vmatmul.mubr.bf16.gmra.mrb[0].mxu0 %v162
    %v274 = vpop.f32.mrb[0].mxu0
    %v275 = vadd.f32 0.0, %v274
    %v276 = vpop.f32.mrb[0].mxu0
    %v277 = vpop.f32.mrb[0].mxu0
    %v278 = vadd.f32 0.0, %v277
    %v279 = vpop.f32.mrb[0].mxu0
    %280 = vmatprep.mubr.bf16.mxu0 0
    %281 = vmatmul.mubr.bf16.gmra.mrb[0].mxu0 %v163
    %v282 = vpop.f32.mrb[0].mxu0
    %v283 = vadd.f32 0.0, %v282
    %v284 = vpop.f32.mrb[0].mxu0
    %v285 = vpop.f32.mrb[0].mxu0
    %v286 = vadd.f32 0.0, %v285
    %v287 = vpop.f32.mrb[0].mxu0
    %288 = vmatprep.mubr.bf16.mxu0 0
    %289 = vmatmul.mubr.bf16.gmra.mrb[0].mxu0 %v164
    %v290 = vpop.f32.mrb[0].mxu0
    %v291 = vadd.f32 0.0, %v290
    %v292 = vpop.f32.mrb[0].mxu0
    %v293 = vpop.f32.mrb[0].mxu0
    %v294 = vadd.f32 0.0, %v293
    %v295 = vpop.f32.mrb[0].mxu0
    %296 = vmatprep.mubr.bf16.mxu0 0
    %297 = vmatmul.mubr.bf16.gmra.mrb[0].mxu0 %v165
    %v298 = vpop.f32.mrb[0].mxu0
    %v299 = vadd.f32 0.0, %v298
    %v300 = vpop.f32.mrb[0].mxu0
    %v301 = vpop.f32.mrb[0].mxu0
    %v302 = vadd.f32 0.0, %v301
    %v303 = vpop.f32.mrb[0].mxu0
    %304 = vmatprep.mubr.bf16.mxu0 0
    %305 = vmatmul.mubr.bf16.gmra.mrb[0].mxu0 %v166
    %v306 = vpop.f32.mrb[0].mxu0
    %v307 = vadd.f32 0.0, %v306
    %v308 = vpop.f32.mrb[0].mxu0
    %v309 = vpop.f32.mrb[0].mxu0
    %v310 = vadd.f32 0.0, %v309
    %v311 = vpop.f32.mrb[0].mxu0
    %312 = vmatprep.mubr.bf16.mxu0 0
    %313 = vmatmul.mubr.bf16.gmra.mrb[0].mxu0 %v167
    %v314 = vpop.f32.mrb[0].mxu0
    %v315 = vadd.f32 0.0, %v314
    %v316 = vpop.f32.mrb[0].mxu0
    %v317 = vpop.f32.mrb[0].mxu0
    %v318 = vadd.f32 0.0, %v317
    %v319 = vpop.f32.mrb[0].mxu0
    %320 = vdwg.mxu0
    %v321 = vadd.f32 %v80, %v259
    %v322 = vadd.f32 %v81, %v262
    %v323 = vadd.f32 %v82, %v267
    %v324 = vadd.f32 %v83, %v270
    %v325 = vadd.f32 %v84, %v275
    %v326 = vadd.f32 %v85, %v278
    %v327 = vadd.f32 %v86, %v283
    %v328 = vadd.f32 %v87, %v286
    %v329 = vadd.f32 %v88, %v291
    %v330 = vadd.f32 %v89, %v294
    %v331 = vadd.f32 %v90, %v299
    %v332 = vadd.f32 %v91, %v302
    %v333 = vadd.f32 %v92, %v307
    %v334 = vadd.f32 %v93, %v310
    %v335 = vadd.f32 %v94, %v315
    %v336 = vadd.f32 %v95, %v318
    %337 = vst [vmem:[#allocation2] sm:$0xff] %v321
    %338 = vst [vmem:[#allocation2 + $0x8] sm:$0xff] %v322
    %339 = vst [vmem:[#allocation2 + $0x10] sm:$0xff] %v323
    %340 = vst [vmem:[#allocation2 + $0x18] sm:$0xff] %v324
    %341 = vst [vmem:[#allocation2 + $0x20] sm:$0xff] %v325
    %342 = vst [vmem:[#allocation2 + $0x28] sm:$0xff] %v326
    %343 = vst [vmem:[#allocation2 + $0x30] sm:$0xff] %v327
    %344 = vst [vmem:[#allocation2 + $0x38] sm:$0xff] %v328
    %345 = vst [vmem:[#allocation2 + $0x40] sm:$0xff] %v329
    %346 = vst [vmem:[#allocation2 + $0x48] sm:$0xff] %v330
    %347 = vst [vmem:[#allocation2 + $0x50] sm:$0xff] %v331
    %348 = vst [vmem:[#allocation2 + $0x58] sm:$0xff] %v332
    %349 = vst [vmem:[#allocation2 + $0x60] sm:$0xff] %v333
    %350 = vst [vmem:[#allocation2 + $0x68] sm:$0xff] %v334
    %351 = vst [vmem:[#allocation2 + $0x70] sm:$0xff] %v335
    %352 = vst [vmem:[#allocation2 + $0x78] sm:$0xff] %v336
    // Predicated region
    $region34: #{tpu_custom_call.1} parent=1 // pred_check
      %p353 = pneg %p60
    $region35: #{tpu_custom_call.1} parent=1 // pred_check_branch
      %355 = sbr.rel (%p353) target = $region37
    $region36: #{tpu_custom_call.1} parent=1 // pred_region
      %v356 = vld [vmem:[#allocation2] sm:$0xff]
      %v357 = vld [vmem:[#allocation2 + $0x8] sm:$0xff]
      %v358 = vld [vmem:[#allocation2 + $0x10] sm:$0xff]
      %v359 = vld [vmem:[#allocation2 + $0x18] sm:$0xff]
      %v360 = vld [vmem:[#allocation2 + $0x20] sm:$0xff]
      %v361 = vld [vmem:[#allocation2 + $0x28] sm:$0xff]
      %v362 = vld [vmem:[#allocation2 + $0x30] sm:$0xff]
      %v363 = vld [vmem:[#allocation2 + $0x38] sm:$0xff]
      %v364 = vld [vmem:[#allocation2 + $0x40] sm:$0xff]
      %v365 = vld [vmem:[#allocation2 + $0x48] sm:$0xff]
      %v366 = vld [vmem:[#allocation2 + $0x50] sm:$0xff]
      %v367 = vld [vmem:[#allocation2 + $0x58] sm:$0xff]
      %v368 = vld [vmem:[#allocation2 + $0x60] sm:$0xff]
      %v369 = vld [vmem:[#allocation2 + $0x68] sm:$0xff]
      %v370 = vld [vmem:[#allocation2 + $0x70] sm:$0xff]
      %v371 = vld [vmem:[#allocation2 + $0x78] sm:$0xff]
      %v372 = vld [vmem:[#allocation8] sm:$0xff]
      %v373 = vld [vmem:[#allocation8 + $0x8] sm:$0xff]
      %v374 = vld [vmem:[#allocation8 + $0x10] sm:$0xff]
      %v375 = vld [vmem:[#allocation8 + $0x18] sm:$0xff]
      %v376 = vld [vmem:[#allocation8 + $0x20] sm:$0xff]
      %v377 = vld [vmem:[#allocation8 + $0x28] sm:$0xff]
      %v378 = vld [vmem:[#allocation8 + $0x30] sm:$0xff]
      %v379 = vld [vmem:[#allocation8 + $0x38] sm:$0xff]
      %v380 = vld [vmem:[#allocation8 + $0x40] sm:$0xff]
      %v381 = vld [vmem:[#allocation8 + $0x48] sm:$0xff]
      %v382 = vld [vmem:[#allocation8 + $0x50] sm:$0xff]
      %v383 = vld [vmem:[#allocation8 + $0x58] sm:$0xff]
      %v384 = vld [vmem:[#allocation8 + $0x60] sm:$0xff]
      %v385 = vld [vmem:[#allocation8 + $0x68] sm:$0xff]
      %v386 = vld [vmem:[#allocation8 + $0x70] sm:$0xff]
      %v387 = vld [vmem:[#allocation8 + $0x78] sm:$0xff]
      %v388 = vld [vmem:[%s3] sm:$0x1]
      %v390 = vlaneseq
      %v391 = vshrl.u32 %v390, 7
      %v392 = vsub.s32 0, %v391
      %v393 = vrot.slane %v388, %v392
      %395 = vmatprep.subr.mxu0 0.0
      %396 = vmatpush1.msra.mxu0 %v372
      %397 = vmatprep.subr.mxu0 0.0
      %398 = vmatpush1.msra.mxu0 %v373
      %399 = vmatprep.subr.mxu0 0.0
      %400 = vmatpush1.msra.mxu0 %v374
      %401 = vmatprep.subr.mxu0 0.0
      %402 = vmatpush1.msra.mxu0 %v375
      %403 = vmatprep.subr.mxu0 0.0
      %404 = vmatpush1.msra.mxu0 %v376
      %405 = vmatprep.subr.mxu0 0.0
      %406 = vmatpush1.msra.mxu0 %v377
      %407 = vmatprep.subr.mxu0 0.0
      %408 = vmatpush1.msra.mxu0 %v378
      %409 = vmatprep.subr.mxu0 0.0
      %410 = vmatpush1.msra.mxu0 %v379
      %411 = vmatprep.subr.mxu0 0.0
      %412 = vmatpush1.msra.mxu0 %v380
      %413 = vmatprep.subr.mxu0 0.0
      %414 = vmatpush1.msra.mxu0 %v381
      %415 = vmatprep.subr.mxu0 0.0
      %416 = vmatpush1.msra.mxu0 %v382
      %417 = vmatprep.subr.mxu0 0.0
      %418 = vmatpush1.msra.mxu0 %v383
      %419 = vmatprep.subr.mxu0 0.0
      %420 = vmatpush1.msra.mxu0 %v384
      %421 = vmatprep.subr.mxu0 0.0
      %422 = vmatpush1.msra.mxu0 %v385
      %423 = vmatprep.subr.mxu0 0.0
      %424 = vmatpush1.msra.mxu0 %v386
      %425 = vmatprep.subr.mxu0 0.0
      %426 = vmatpush1.msra.mxu0 %v387
      %427 = vmatprep.subr.mxu0 0.0
      %428 = vmatpush1.msra.mxu0 0.0
      %429 = vmatprep.subr.mxu0 0.0
      %430 = vmatpush1.msra.mxu0 0.0
      %431 = vmatprep.subr.mxu0 0.0
      %432 = vmatpush1.msra.mxu0 0.0
      %433 = vmatprep.subr.mxu0 0.0
      %434 = vmatpush1.msra.mxu0 0.0
      %435 = vmatprep.subr.mxu0 0.0
      %436 = vmatpush1.msra.mxu0 0.0
      %437 = vmatprep.subr.mxu0 0.0
      %438 = vmatpush1.msra.mxu0 0.0
      %439 = vmatprep.subr.mxu0 0.0
      %440 = vmatpush1.msra.mxu0 0.0
      %441 = vmatprep.subr.mxu0 0.0
      %442 = vmatpush1.msra.mxu0 0.0
      %443 = vmatprep.subr.mxu0 0.0
      %444 = vmatpush1.msra.mxu0 0.0
      %445 = vmatprep.subr.mxu0 0.0
      %446 = vmatpush1.msra.mxu0 0.0
      %447 = vmatprep.subr.mxu0 0.0
      %448 = vmatpush1.msra.mxu0 0.0
      %449 = vmatprep.subr.mxu0 0.0
      %450 = vmatpush1.msra.mxu0 0.0
      %451 = vmatprep.subr.mxu0 0.0
      %452 = vmatpush1.msra.mxu0 0.0
      %453 = vmatprep.subr.mxu0 0.0
      %454 = vmatpush1.msra.mxu0 0.0
      %455 = vmatprep.subr.mxu0 0.0
      %456 = vmatpush1.msra.mxu0 0.0
      %457 = vmatprep.subr.mxu0 0.0
      %458 = vmatpush1.msra.mxu0 0.0
      %459 = vmatprep.mubr.f32.mxu0 0.0
      %460 = vmatmul.mubr.f32.gmra.mrb[0].mxu0 %v356
      %v461 = vpop.f32.mrb[0].mxu0
      %v462 = vadd.f32 %v393, %v461
      %v463 = vpop.f32.mrb[0].mxu0
      %464 = vmatprep.mubr.f32.mxu0 0.0
      %465 = vmatmul.mubr.f32.gmra.mrb[0].mxu0 %v357
      %v466 = vpop.f32.mrb[0].mxu0
      %v467 = vadd.f32 %v393, %v466
      %v468 = vpop.f32.mrb[0].mxu0
      %469 = vmatprep.mubr.f32.mxu0 0.0
      %470 = vmatmul.mubr.f32.gmra.mrb[0].mxu0 %v358
      %v471 = vpop.f32.mrb[0].mxu0
      %v472 = vadd.f32 %v393, %v471
      %v473 = vpop.f32.mrb[0].mxu0
      %474 = vmatprep.mubr.f32.mxu0 0.0
      %475 = vmatmul.mubr.f32.gmra.mrb[0].mxu0 %v359
      %v476 = vpop.f32.mrb[0].mxu0
      %v477 = vadd.f32 %v393, %v476
      %v478 = vpop.f32.mrb[0].mxu0
      %479 = vmatprep.mubr.f32.mxu0 0.0
      %480 = vmatmul.mubr.f32.gmra.mrb[0].mxu0 %v360
      %v481 = vpop.f32.mrb[0].mxu0
      %v482 = vadd.f32 %v393, %v481
      %v483 = vpop.f32.mrb[0].mxu0
      %484 = vmatprep.mubr.f32.mxu0 0.0
      %485 = vmatmul.mubr.f32.gmra.mrb[0].mxu0 %v361
      %v486 = vpop.f32.mrb[0].mxu0
      %v487 = vadd.f32 %v393, %v486
      %v488 = vpop.f32.mrb[0].mxu0
      %489 = vmatprep.mubr.f32.mxu0 0.0
      %490 = vmatmul.mubr.f32.gmra.mrb[0].mxu0 %v362
      %v491 = vpop.f32.mrb[0].mxu0
      %v492 = vadd.f32 %v393, %v491
      %v493 = vpop.f32.mrb[0].mxu0
      %494 = vmatprep.mubr.f32.mxu0 0.0
      %495 = vmatmul.mubr.f32.gmra.mrb[0].mxu0 %v363
      %v496 = vpop.f32.mrb[0].mxu0
      %v497 = vadd.f32 %v393, %v496
      %v498 = vpop.f32.mrb[0].mxu0
      %499 = vmatprep.mubr.f32.mxu0 0.0
      %500 = vmatmul.mubr.f32.gmra.mrb[0].mxu0 %v364
      %v501 = vpop.f32.mrb[0].mxu0
      %v502 = vadd.f32 %v393, %v501
      %v503 = vpop.f32.mrb[0].mxu0
      %504 = vmatprep.mubr.f32.mxu0 0.0
      %505 = vmatmul.mubr.f32.gmra.mrb[0].mxu0 %v365
      %v506 = vpop.f32.mrb[0].mxu0
      %v507 = vadd.f32 %v393, %v506
      %v508 = vpop.f32.mrb[0].mxu0
      %509 = vmatprep.mubr.f32.mxu0 0.0
      %510 = vmatmul.mubr.f32.gmra.mrb[0].mxu0 %v366
      %v511 = vpop.f32.mrb[0].mxu0
      %v512 = vadd.f32 %v393, %v511
      %v513 = vpop.f32.mrb[0].mxu0
      %514 = vmatprep.mubr.f32.mxu0 0.0
      %515 = vmatmul.mubr.f32.gmra.mrb[0].mxu0 %v367
      %v516 = vpop.f32.mrb[0].mxu0
      %v517 = vadd.f32 %v393, %v516
      %v518 = vpop.f32.mrb[0].mxu0
      %519 = vmatprep.mubr.f32.mxu0 0.0
      %520 = vmatmul.mubr.f32.gmra.mrb[0].mxu0 %v368
      %v521 = vpop.f32.mrb[0].mxu0
      %v522 = vadd.f32 %v393, %v521
      %v523 = vpop.f32.mrb[0].mxu0
      %524 = vmatprep.mubr.f32.mxu0 0.0
      %525 = vmatmul.mubr.f32.gmra.mrb[0].mxu0 %v369
      %v526 = vpop.f32.mrb[0].mxu0
      %v527 = vadd.f32 %v393, %v526
      %v528 = vpop.f32.mrb[0].mxu0
      %529 = vmatprep.mubr.f32.mxu0 0.0
      %530 = vmatmul.mubr.f32.gmra.mrb[0].mxu0 %v370
      %v531 = vpop.f32.mrb[0].mxu0
      %v532 = vadd.f32 %v393, %v531
      %v533 = vpop.f32.mrb[0].mxu0
      %534 = vmatprep.mubr.f32.mxu0 0.0
      %535 = vmatmul.mubr.f32.gmra.mrb[0].mxu0 %v371
      %v536 = vpop.f32.mrb[0].mxu0
      %v537 = vadd.f32 %v393, %v536
      %v538 = vpop.f32.mrb[0].mxu0
      %539 = vdwg.mxu0
      %v540 = vmax.f32 %v462, 0.0
      %v541 = vmax.f32 %v467, 0.0
      %v542 = vmax.f32 %v472, 0.0
      %v543 = vmax.f32 %v477, 0.0
      %v544 = vmax.f32 %v482, 0.0
      %v545 = vmax.f32 %v487, 0.0
      %v546 = vmax.f32 %v492, 0.0
      %v547 = vmax.f32 %v497, 0.0
      %v548 = vmax.f32 %v502, 0.0
      %v549 = vmax.f32 %v507, 0.0
      %v550 = vmax.f32 %v512, 0.0
      %v551 = vmax.f32 %v517, 0.0
      %v552 = vmax.f32 %v522, 0.0
      %v553 = vmax.f32 %v527, 0.0
      %v554 = vmax.f32 %v532, 0.0
      %v555 = vmax.f32 %v537, 0.0
      %v556 = vpack.c.bf16 %v541, %v540
      %v557 = vpack.c.bf16 %v543, %v542
      %v558 = vpack.c.bf16 %v545, %v544
      %v559 = vpack.c.bf16 %v547, %v546
      %v560 = vpack.c.bf16 %v549, %v548
      %v561 = vpack.c.bf16 %v551, %v550
      %v562 = vpack.c.bf16 %v553, %v552
      %v563 = vpack.c.bf16 %v555, %v554
      %v572 = vunpack.c.l.b16 %v556
      %v573 = vunpack.c.h.b16 %v556
      %v574 = vunpack.c.l.b16 %v557
      %v575 = vunpack.c.h.b16 %v557
      %v576 = vunpack.c.l.b16 %v558
      %v577 = vunpack.c.h.b16 %v558
      %v578 = vunpack.c.l.b16 %v559
      %v579 = vunpack.c.h.b16 %v559
      %v580 = vunpack.c.l.b16 %v560
      %v581 = vunpack.c.h.b16 %v560
      %v582 = vunpack.c.l.b16 %v561
      %v583 = vunpack.c.h.b16 %v561
      %v584 = vunpack.c.l.b16 %v562
      %v585 = vunpack.c.h.b16 %v562
      %v586 = vunpack.c.l.b16 %v563
      %v587 = vunpack.c.h.b16 %v563
      %v588 = vpack.c.b16 %v572, %v572
      %v589 = vpack.c.b16 %v573, %v573
      %v590 = vpack.c.b16 %v574, %v574
      %v591 = vpack.c.b16 %v575, %v575
      %v592 = vpack.c.b16 %v576, %v576
      %v593 = vpack.c.b16 %v577, %v577
      %v594 = vpack.c.b16 %v578, %v578
      %v595 = vpack.c.b16 %v579, %v579
      %v596 = vpack.c.b16 %v580, %v580
      %v597 = vpack.c.b16 %v581, %v581
      %v598 = vpack.c.b16 %v582, %v582
      %v599 = vpack.c.b16 %v583, %v583
      %v600 = vpack.c.b16 %v584, %v584
      %v601 = vpack.c.b16 %v585, %v585
      %v602 = vpack.c.b16 %v586, %v586
      %v603 = vpack.c.b16 %v587, %v587
      %620 = vst [vmem:[#allocation9] sm:$0xf] %v588
      %621 = vst [vmem:[#allocation9 + $0x4] sm:$0xf] %v589
      %622 = vst [vmem:[#allocation9 + $0x8] sm:$0xf] %v590
      %623 = vst [vmem:[#allocation9 + $0xc] sm:$0xf] %v591
      %624 = vst [vmem:[#allocation9 + $0x10] sm:$0xf] %v592
      %625 = vst [vmem:[#allocation9 + $0x14] sm:$0xf] %v593
      %626 = vst [vmem:[#allocation9 + $0x18] sm:$0xf] %v594
      %627 = vst [vmem:[#allocation9 + $0x1c] sm:$0xf] %v595
      %628 = vst [vmem:[#allocation9 + $0x20] sm:$0xf] %v596
      %629 = vst [vmem:[#allocation9 + $0x24] sm:$0xf] %v597
      %630 = vst [vmem:[#allocation9 + $0x28] sm:$0xf] %v598
      %631 = vst [vmem:[#allocation9 + $0x2c] sm:$0xf] %v599
      %632 = vst [vmem:[#allocation9 + $0x30] sm:$0xf] %v600
      %633 = vst [vmem:[#allocation9 + $0x34] sm:$0xf] %v601
      %634 = vst [vmem:[#allocation9 + $0x38] sm:$0xf] %v602
      %635 = vst [vmem:[#allocation9 + $0x3c] sm:$0xf] %v603
    $region37: #{tpu_custom_call.1} parent=1 // pred_fallthru
      _
    // Predicated region
    $region38: #{tpu_custom_call.1} parent=1 // pred_check
      _
    $region39: #{tpu_custom_call.1} parent=1 // pred_check_branch
      %637 = sbr.rel (0) target = $region41
    $region40: #{tpu_custom_call.1} parent=1 // pred_region
      %s639 = ssub.s32 1024, 1024
      %640 = vsyncadd [#allocation5], %s639
      %s641 = sshll.u32 [#allocation9], 4
      %s642 = int_to_ptr.vmem [resolvable:$true] %s641
      %647 = dma.vmem_to_hbm [thread:$0]  %s642, 1024, %s4, [#allocation5], 64, 64, 4
    $region41: #{tpu_custom_call.1} parent=1 // pred_fallthru
      _
    // Predicated region
    $region42: #{tpu_custom_call.1} parent=1 // pred_check
      _
    $region43: #{tpu_custom_call.1} parent=1 // pred_check_branch
      %649 = sbr.rel (0) target = $region45
    $region44: #{tpu_custom_call.1} parent=1 // pred_region
      %650 = dma.done [#allocation5], 1024
    $region45: #{tpu_custom_call.1} parent=1 // pred_fallthru
      _
    %651 = vsyncpa [#allocation4], 1
    %652 = vsyncpa [#allocation7], 1
    %653 = vsyncpa [#allocation5], 1

</llo_original>
